<compile_context>
chip_gen: v7x
topology: tpu7x:2x2x1
jax: 0.10.0
libtpu: 0.0.40
codegen_flags: <defaults>
</compile_context>

<pallas_src>
import jax
import jax.numpy as jnp
from jax.experimental import pallas as pl
from jax.experimental.pallas import tpu as pltpu


def _conv_bn_relu_kernel(x_ref, w_ref, o_ref):
    # x_ref: [N, K+1, HW]  im2col'd activations + ones-row (HW lane-dense)
    # w_ref: [Cout, K+1]   conv weight * BN scale, with BN/bias shift column
    # o_ref: [N, Cout, HW] NCHW-flat output
    w = w_ref[...]                              # resident across the batch loop
    for b in range(x_ref.shape[0]):             # static unroll (N is tiny)
        y = jnp.dot(w, x_ref[b], preferred_element_type=jnp.float32)
        o_ref[b] = jnp.maximum(y, 0.0).astype(o_ref.dtype)


def _basic_conv2d(x_nchw, weight, bias, gamma, beta, running_mean, running_var,
                  *, stride=1, padding=1, eps=1e-3):
    """Conv2d -> BatchNorm2d(eval) -> ReLU, hot path in a Pallas TPU kernel."""
    n, c_in, h, w = x_nchw.shape
    c_out, c_in_w, kh, kw = weight.shape
    assert c_in == c_in_w
    ho = (h + 2 * padding - kh) // stride + 1
    wo = (w + 2 * padding - kw) // stride + 1
    hw = ho * wo
    k_dim = kh * kw * c_in
    k_aug = k_dim + 1                            # +1 ones-row for the shift fold

    # ---- glue (fused under jit): pad + im2col, lane-dense [N, K, HW] -------
    xp = jnp.pad(x_nchw,
                 ((0, 0), (0, 0), (padding, padding), (padding, padding)))
    taps = []
    for i in range(kh):
        for j in range(kw):
            win = xp[:, :, i:i + stride * ho:stride, j:j + stride * wo:stride]
            taps.append(win.reshape(n, c_in, hw))
    # [N, KH*KW, Cin, HW] -> [N, K, HW]   with k = (i*KW + j)*Cin + ci
    x_col = jnp.stack(taps, axis=1).reshape(n, k_dim, hw).astype(jnp.float32)
    ones = jnp.ones((n, 1, hw), jnp.float32)
    x_aug = jnp.concatenate([x_col, ones], axis=1)          # [N, K+1, HW]

    # ---- glue: fold conv bias + BN (eval mode) into the weight -------------
    # y = (W*scale) . x  +  (beta + (bias - mean)*scale)
    scale = (gamma / jnp.sqrt(running_var + eps)).astype(jnp.float32)
    shift = (beta + (bias - running_mean) * scale).astype(jnp.float32)
    w_t = jnp.transpose(weight, (0, 2, 3, 1)).reshape(c_out, k_dim)
    w_t = w_t.astype(jnp.float32) * scale[:, None]
    w_fold = jnp.concatenate([w_t, shift[:, None]], axis=1)  # [Cout, K+1]

    out_flat = pl.pallas_call(
        _conv_bn_relu_kernel,
        out_shape=jax.ShapeDtypeStruct((n, c_out, hw), jnp.float32),
        grid_spec=pltpu.PrefetchScalarGridSpec(
            num_scalar_prefetch=0,
            grid=(1,),   # single step: whole batch (~92 KB) lives in VMEM
            in_specs=[
                pl.BlockSpec((n, k_aug, hw), lambda _: (0, 0, 0)),
                pl.BlockSpec((c_out, k_aug), lambda _: (0, 0)),
            ],
            out_specs=pl.BlockSpec((n, c_out, hw), lambda _: (0, 0, 0)),
        ),
        compiler_params=pltpu.CompilerParams(
            dimension_semantics=("arbitrary",)),
    )(x_aug, w_fold)

    # [N, Cout, H*W] is already NCHW-flat: reshape only, no transpose needed.
    return out_flat.reshape(n, c_out, ho, wo)


basic_conv2d = jax.jit(_basic_conv2d,
                       static_argnames=("stride", "padding", "eps"))


def _reference(x, weight, bias, gamma, beta, mean, var, *, stride=1,
               padding=1, eps=1e-3):
    y = jax.lax.conv_general_dilated(
        x, weight, window_strides=(stride, stride),
        padding=[(padding, padding), (padding, padding)],
        dimension_numbers=("NCHW", "OIHW", "NCHW"))
    y = y + bias.reshape(1, -1, 1, 1)
    y = (y - mean.reshape(1, -1, 1, 1)) / jnp.sqrt(var.reshape(1, -1, 1, 1) + eps)
    y = y * gamma.reshape(1, -1, 1, 1) + beta.reshape(1, -1, 1, 1)
    return jnp.maximum(y, 0.0)


if __name__ == "__main__":
    N, C_IN, C_OUT, H, W, K = 2, 4, 8, 16, 16, 3

    key = jax.random.PRNGKey(0)
    k_x, k_w, k_b, k_g, k_be, k_m, k_v = jax.random.split(key, 7)

    x = jax.random.normal(k_x, (N, C_IN, H, W), jnp.float32)
    weight = 0.1 * jax.random.normal(k_w, (C_OUT, C_IN, K, K), jnp.float32)
    bias = 0.1 * jax.random.normal(k_b, (C_OUT,), jnp.float32)
    gamma = 1.0 + 0.1 * jax.random.normal(k_g, (C_OUT,), jnp.float32)
    beta = 0.1 * jax.random.normal(k_be, (C_OUT,), jnp.float32)
    running_mean = 0.1 * jax.random.normal(k_m, (C_OUT,), jnp.float32)
    running_var = jnp.abs(1.0 + 0.1 * jax.random.normal(k_v, (C_OUT,), jnp.float32))

    out = basic_conv2d(x, weight, bias, gamma, beta, running_mean, running_var,
                       stride=1, padding=1, eps=1e-3)
    out = jax.block_until_ready(out)

    ref = _reference(x, weight, bias, gamma, beta, running_mean, running_var,
                     stride=1, padding=1, eps=1e-3)
    assert out.shape == (N, C_OUT, H, W)
    assert jnp.max(jnp.abs(out - ref)) < 1e-4

    print("KERNEL_OK")
</pallas_src>

<mosaic_0001>
module attributes {stable_mosaic.version = 11 : i64} {
  func.func @_conv_bn_relu_kernel(%arg0: i32, %arg1: memref<2x37x256xf32, #tpu.memory_space<vmem>>, %arg2: memref<8x37xf32, #tpu.memory_space<vmem>>, %arg3: memref<2x8x256xf32, #tpu.memory_space<vmem>>) attributes {dimension_semantics = [#tpu.dimension_semantics<arbitrary>], iteration_bounds = array<i64: 1>, scalar_prefetch = 0 : i64, scratch_operands = 0 : i64, tpu.core_type = #tpu.core_type<tc>, window_params = [{pipeline_mode = #tpu.pipeline_mode<synchronous>, transform_indices = @transform_0, window_bounds = array<i64: 2, 37, 256>}, {pipeline_mode = #tpu.pipeline_mode<synchronous>, transform_indices = @transform_1, window_bounds = array<i64: 8, 37>}, {pipeline_mode = #tpu.pipeline_mode<synchronous>, transform_indices = @transform_2, window_bounds = array<i64: 2, 8, 256>}]} {
    %c0 = arith.constant 0 : index
    %c0_0 = arith.constant 0 : index
    %0 = vector.load %arg2[%c0, %c0_0] : memref<8x37xf32, #tpu.memory_space<vmem>>, vector<8x37xf32>
    %c0_1 = arith.constant 0 : index
    %c0_2 = arith.constant 0 : index
    %c0_3 = arith.constant 0 : index
    %1 = vector.load %arg1[%c0_1, %c0_2, %c0_3] : memref<2x37x256xf32, #tpu.memory_space<vmem>>, vector<1x37x256xf32>
    %2 = vector.shape_cast %1 : vector<1x37x256xf32> to vector<37x256xf32>
    %cst = arith.constant dense<0.000000e+00> : vector<8x256xf32>
    %3 = tpu.matmul %0, %2, %cst {dimension_numbers = #tpu.dot_dimension_numbers<[1], [0], [0], [1], [0, 0, 1, 1], [], []>} : vector<8x37xf32>, vector<37x256xf32>, vector<8x256xf32> -> vector<8x256xf32>
    %cst_4 = arith.constant 0.000000e+00 : f32
    %4 = vector.broadcast %cst_4 : f32 to vector<8x256xf32>
    %5 = arith.maximumf %3, %4 : vector<8x256xf32>
    %c0_5 = arith.constant 0 : index
    %c0_6 = arith.constant 0 : index
    %c0_7 = arith.constant 0 : index
    %6 = vector.load %arg3[%c0_5, %c0_6, %c0_7] : memref<2x8x256xf32, #tpu.memory_space<vmem>>, vector<1x8x256xf32>
    %7 = vector.shape_cast %6 : vector<1x8x256xf32> to vector<8x256xf32>
    %8 = vector.shape_cast %5 : vector<8x256xf32> to vector<1x8x256xf32>
    tpu.vector_store %arg3[%c0_5, %c0_6, %c0_7], %8 {strides = array<i32>} : memref<2x8x256xf32, #tpu.memory_space<vmem>>, vector<1x8x256xf32>,
    %c1 = arith.constant 1 : index
    %c0_8 = arith.constant 0 : index
    %c0_9 = arith.constant 0 : index
    %9 = vector.load %arg1[%c1, %c0_8, %c0_9] : memref<2x37x256xf32, #tpu.memory_space<vmem>>, vector<1x37x256xf32>
    %10 = vector.shape_cast %9 : vector<1x37x256xf32> to vector<37x256xf32>
    %cst_10 = arith.constant dense<0.000000e+00> : vector<8x256xf32>
    %11 = tpu.matmul %0, %10, %cst_10 {dimension_numbers = #tpu.dot_dimension_numbers<[1], [0], [0], [1], [0, 0, 1, 1], [], []>} : vector<8x37xf32>, vector<37x256xf32>, vector<8x256xf32> -> vector<8x256xf32>
    %cst_11 = arith.constant 0.000000e+00 : f32
    %12 = vector.broadcast %cst_11 : f32 to vector<8x256xf32>
    %13 = arith.maximumf %11, %12 : vector<8x256xf32>
    %c1_12 = arith.constant 1 : index
    %c0_13 = arith.constant 0 : index
    %c0_14 = arith.constant 0 : index
    %14 = vector.load %arg3[%c1_12, %c0_13, %c0_14] : memref<2x8x256xf32, #tpu.memory_space<vmem>>, vector<1x8x256xf32>
    %15 = vector.shape_cast %14 : vector<1x8x256xf32> to vector<8x256xf32>
    %16 = vector.shape_cast %13 : vector<8x256xf32> to vector<1x8x256xf32>
    tpu.vector_store %arg3[%c1_12, %c0_13, %c0_14], %16 {strides = array<i32>} : memref<2x8x256xf32, #tpu.memory_space<vmem>>, vector<1x8x256xf32>,
    return
  }
  func.func @transform_0(%arg0: i32) -> (i32, i32, i32) {
    %c0_i32 = arith.constant 0 : i32
    %c0_i32_0 = arith.constant 0 : i32
    %c0_i32_1 = arith.constant 0 : i32
    %c0_i32_2 = arith.constant 0 : i32
    return %c0_i32, %c0_i32_0, %c0_i32_1 : i32, i32, i32
  }
  func.func @transform_1(%arg0: i32) -> (i32, i32) {
    %c0_i32 = arith.constant 0 : i32
    %c0_i32_0 = arith.constant 0 : i32
    %c0_i32_1 = arith.constant 0 : i32
    return %c0_i32, %c0_i32_0 : i32, i32
  }
  func.func @transform_2(%arg0: i32) -> (i32, i32, i32) {
    %c0_i32 = arith.constant 0 : i32
    %c0_i32_0 = arith.constant 0 : i32
    %c0_i32_1 = arith.constant 0 : i32
    %c0_i32_2 = arith.constant 0 : i32
    return %c0_i32, %c0_i32_0, %c0_i32_1 : i32, i32, i32
  }
}

</mosaic_0001>

<llo_original>
// kernel: _basic_conv2d.1
$region0: #{_basic_conv2d.1}
  #allocation0 [shape = 'u32[]', space=smem, size = 0x4, offset = 0x4, fixed_abs, tag = 'smem constant byte address 0x4 - core index']
  #allocation1 [shape = 'u32[144,128]{1,0:T(1,128)}', space=vmem, size = 0x12000, scoped, tag = 'internal scratch']
  %s0 = inlined_call_operand.vmem [shape: f32[2,37,256], index: 0, kind: input, shape index: {}]
  %s1 = inlined_call_operand.vmem [shape: f32[8,37], index: 1, kind: input, shape index: {}]
  %s2 = inlined_call_operand.vmem [shape: f32[2,8,256], index: 2, kind: output, shape index: {}]
  %s3 = sld [smem:[#allocation0]]
  $region18: #{_basic_conv2d.1} parent=0
    _
  %s5 = ssub.s32 1, %s3
  %s6 = scalar_select 0, %s5, %s3
  // Predicated region
  $region2: #{_basic_conv2d.1} parent=0 // pred_check
    _
  $region3: #{_basic_conv2d.1} parent=0 // pred_check_branch
    %8 = sbr.rel (0) target = $region5
  $region4: #{_basic_conv2d.1} parent=0 // pred_region
    _
  $region5: #{_basic_conv2d.1} parent=0 // pred_fallthru
    _
  // Predicated region
  $region6: #{_basic_conv2d.1} parent=0 // pred_check
    _
  $region7: #{_basic_conv2d.1} parent=0 // pred_check_branch
    %10 = sbr.rel (0) target = $region9
  $region8: #{_basic_conv2d.1} parent=0 // pred_region
    _
  $region9: #{_basic_conv2d.1} parent=0 // pred_fallthru
    _
  %v11 = vld [vmem:[%s1] sm:$0xff]
  %v12 = vld [vmem:[%s0] sm:$0xff]
  %v13 = vld [vmem:[%s0 + $0x8] sm:$0xff]
  %v14 = vld [vmem:[%s0 + $0x10] sm:$0xff]
  %v15 = vld [vmem:[%s0 + $0x18] sm:$0xff]
  %v16 = vld [vmem:[%s0 + $0x20] sm:$0xff]
  %v17 = vld [vmem:[%s0 + $0x28] sm:$0xff]
  %v18 = vld [vmem:[%s0 + $0x30] sm:$0xff]
  %v19 = vld [vmem:[%s0 + $0x38] sm:$0xff]
  %v20 = vld [vmem:[%s0 + $0x40] sm:$0x1f]
  %v21 = vld [vmem:[%s0 + $0x48] sm:$0x1f]
  %vm22 = vcmask 302080
  %v24 = vsel %vm22, %v11, 0
  %vm26 = vcmask 1044480
  %v28 = vsel %vm26, %v20, 0
  %v31 = vsel %vm26, %v21, 0
  %33 = vmatprep.subr.mxu0 %v13
  %34 = vmatpush1.msra.mxu0 %v12
  %35 = vmatprep.subr.mxu0 %v15
  %36 = vmatpush1.msra.mxu0 %v14
  %37 = vmatprep.subr.mxu0 %v17
  %38 = vmatpush1.msra.mxu0 %v16
  %39 = vmatprep.subr.mxu0 %v19
  %40 = vmatpush1.msra.mxu0 %v18
  %41 = vmatprep.subr.mxu0 %v31
  %42 = vmatpush1.msra.mxu0 %v28
  %43 = vmatprep.subr.mxu0 0.0
  %44 = vmatpush1.msra.mxu0 0.0
  %45 = vmatprep.subr.mxu0 0.0
  %46 = vmatpush1.msra.mxu0 0.0
  %47 = vmatprep.subr.mxu0 0.0
  %48 = vmatpush1.msra.mxu0 0.0
  %49 = vmatprep.subr.mxu0 0.0
  %50 = vmatpush1.msra.mxu0 0.0
  %51 = vmatprep.subr.mxu0 0.0
  %52 = vmatpush1.msra.mxu0 0.0
  %53 = vmatprep.subr.mxu0 0.0
  %54 = vmatpush1.msra.mxu0 0.0
  %55 = vmatprep.subr.mxu0 0.0
  %56 = vmatpush1.msra.mxu0 0.0
  %57 = vmatprep.subr.mxu0 0.0
  %58 = vmatpush1.msra.mxu0 0.0
  %59 = vmatprep.subr.mxu0 0.0
  %60 = vmatpush1.msra.mxu0 0.0
  %61 = vmatprep.subr.mxu0 0.0
  %62 = vmatpush1.msra.mxu0 0.0
  %63 = vmatprep.subr.mxu0 0.0
  %64 = vmatpush1.msra.mxu0 0.0
  %65 = vmatprep.subr.mxu0 0.0
  %66 = vmatpush1.msra.mxu0 0.0
  %67 = vmatprep.subr.mxu0 0.0
  %68 = vmatpush1.msra.mxu0 0.0
  %69 = vmatprep.subr.mxu0 0.0
  %70 = vmatpush1.msra.mxu0 0.0
  %71 = vmatprep.subr.mxu0 0.0
  %72 = vmatpush1.msra.mxu0 0.0
  %73 = vmatprep.subr.mxu0 0.0
  %74 = vmatpush1.msra.mxu0 0.0
  %75 = vmatprep.subr.mxu0 0.0
  %76 = vmatpush1.msra.mxu0 0.0
  %77 = vmatprep.subr.mxu0 0.0
  %78 = vmatpush1.msra.mxu0 0.0
  %79 = vmatprep.subr.mxu0 0.0
  %80 = vmatpush1.msra.mxu0 0.0
  %81 = vmatprep.subr.mxu0 0.0
  %82 = vmatpush1.msra.mxu0 0.0
  %83 = vmatprep.subr.mxu0 0.0
  %84 = vmatpush1.msra.mxu0 0.0
  %85 = vmatprep.subr.mxu0 0.0
  %86 = vmatpush1.msra.mxu0 0.0
  %87 = vmatprep.subr.mxu0 0.0
  %88 = vmatpush1.msra.mxu0 0.0
  %89 = vmatprep.subr.mxu0 0.0
  %90 = vmatpush1.msra.mxu0 0.0
  %91 = vmatprep.subr.mxu0 0.0
  %92 = vmatpush1.msra.mxu0 0.0
  %93 = vmatprep.subr.mxu0 0.0
  %94 = vmatpush1.msra.mxu0 0.0
  %95 = vmatprep.subr.mxu0 0.0
  %96 = vmatpush1.msra.mxu0 0.0
  %97 = vmatprep.mubr.f32.mxu0 0.0
  %98 = vmatmul.mubr.f32.gmra.mrb[0].mxu0 %v24
  %v99 = vpop.f32.mrb[0].mxu0
  %v100 = vadd.f32 0.0, %v99
  %v101 = vpop.f32.mrb[0].mxu0
  %v102 = vadd.f32 0.0, %v101
  %103 = vdwg.mxu0
  %v104 = vmax.f32 %v100, 0.0
  %v105 = vmax.f32 %v102, 0.0
  %106 = vst [vmem:[%s2] sm:$0xff] %v104
  %107 = vst [vmem:[%s2 + $0x8] sm:$0xff] %v105
  %s108 = scalar_lea.vmem %s0, 80
  %v109 = vld [vmem:[%s108] sm:$0xff]
  %v110 = vld [vmem:[%s108 + $0x8] sm:$0xff]
  %v111 = vld [vmem:[%s108 + $0x10] sm:$0xff]
  %v112 = vld [vmem:[%s108 + $0x18] sm:$0xff]
  %v113 = vld [vmem:[%s108 + $0x20] sm:$0xff]
  %v114 = vld [vmem:[%s108 + $0x28] sm:$0xff]
  %v115 = vld [vmem:[%s108 + $0x30] sm:$0xff]
  %v116 = vld [vmem:[%s108 + $0x38] sm:$0xff]
  %v117 = vld [vmem:[%s108 + $0x40] sm:$0x1f]
  %v118 = vld [vmem:[%s108 + $0x48] sm:$0x1f]
  %v120 = vsel %vm26, %v117, 0
  %v123 = vsel %vm26, %v118, 0
  %125 = vmatprep.subr.mxu0 %v110
  %126 = vmatpush1.msra.mxu0 %v109
  %127 = vmatprep.subr.mxu0 %v112
  %128 = vmatpush1.msra.mxu0 %v111
  %129 = vmatprep.subr.mxu0 %v114
  %130 = vmatpush1.msra.mxu0 %v113
  %131 = vmatprep.subr.mxu0 %v116
  %132 = vmatpush1.msra.mxu0 %v115
  %133 = vmatprep.subr.mxu0 %v123
  %134 = vmatpush1.msra.mxu0 %v120
  %135 = vmatprep.subr.mxu0 0.0
  %136 = vmatpush1.msra.mxu0 0.0
  %137 = vmatprep.subr.mxu0 0.0
  %138 = vmatpush1.msra.mxu0 0.0
  %139 = vmatprep.subr.mxu0 0.0
  %140 = vmatpush1.msra.mxu0 0.0
  %141 = vmatprep.subr.mxu0 0.0
  %142 = vmatpush1.msra.mxu0 0.0
  %143 = vmatprep.subr.mxu0 0.0
  %144 = vmatpush1.msra.mxu0 0.0
  %145 = vmatprep.subr.mxu0 0.0
  %146 = vmatpush1.msra.mxu0 0.0
  %147 = vmatprep.subr.mxu0 0.0
  %148 = vmatpush1.msra.mxu0 0.0
  %149 = vmatprep.subr.mxu0 0.0
  %150 = vmatpush1.msra.mxu0 0.0
  %151 = vmatprep.subr.mxu0 0.0
  %152 = vmatpush1.msra.mxu0 0.0
  %153 = vmatprep.subr.mxu0 0.0
  %154 = vmatpush1.msra.mxu0 0.0
  %155 = vmatprep.subr.mxu0 0.0
  %156 = vmatpush1.msra.mxu0 0.0
  %157 = vmatprep.subr.mxu0 0.0
  %158 = vmatpush1.msra.mxu0 0.0
  %159 = vmatprep.subr.mxu0 0.0
  %160 = vmatpush1.msra.mxu0 0.0
  %161 = vmatprep.subr.mxu0 0.0
  %162 = vmatpush1.msra.mxu0 0.0
  %163 = vmatprep.subr.mxu0 0.0
  %164 = vmatpush1.msra.mxu0 0.0
  %165 = vmatprep.subr.mxu0 0.0
  %166 = vmatpush1.msra.mxu0 0.0
  %167 = vmatprep.subr.mxu0 0.0
  %168 = vmatpush1.msra.mxu0 0.0
  %169 = vmatprep.subr.mxu0 0.0
  %170 = vmatpush1.msra.mxu0 0.0
  %171 = vmatprep.subr.mxu0 0.0
  %172 = vmatpush1.msra.mxu0 0.0
  %173 = vmatprep.subr.mxu0 0.0
  %174 = vmatpush1.msra.mxu0 0.0
  %175 = vmatprep.subr.mxu0 0.0
  %176 = vmatpush1.msra.mxu0 0.0
  %177 = vmatprep.subr.mxu0 0.0
  %178 = vmatpush1.msra.mxu0 0.0
  %179 = vmatprep.subr.mxu0 0.0
  %180 = vmatpush1.msra.mxu0 0.0
  %181 = vmatprep.subr.mxu0 0.0
  %182 = vmatpush1.msra.mxu0 0.0
  %183 = vmatprep.subr.mxu0 0.0
  %184 = vmatpush1.msra.mxu0 0.0
  %185 = vmatprep.subr.mxu0 0.0
  %186 = vmatpush1.msra.mxu0 0.0
  %187 = vmatprep.subr.mxu0 0.0
  %188 = vmatpush1.msra.mxu0 0.0
  %189 = vmatprep.mubr.f32.mxu0 0.0
  %190 = vmatmul.mubr.f32.gmra.mrb[0].mxu0 %v24
  %v191 = vpop.f32.mrb[0].mxu0
  %v192 = vadd.f32 0.0, %v191
  %v193 = vpop.f32.mrb[0].mxu0
  %v194 = vadd.f32 0.0, %v193
  %195 = vdwg.mxu0
  %v196 = vmax.f32 %v192, 0.0
  %v197 = vmax.f32 %v194, 0.0
  %s198 = scalar_lea.vmem %s2, 16
  %199 = vst [vmem:[%s198] sm:$0xff] %v196
  %200 = vst [vmem:[%s198 + $0x8] sm:$0xff] %v197
  // Predicated region
  $region10: #{_basic_conv2d.1} parent=0 // pred_check
    _
  $region11: #{_basic_conv2d.1} parent=0 // pred_check_branch
    %202 = sbr.rel (0) target = $region13
  $region12: #{_basic_conv2d.1} parent=0 // pred_region
    _
  $region13: #{_basic_conv2d.1} parent=0 // pred_fallthru
    _
  // Predicated region
  $region14: #{_basic_conv2d.1} parent=0 // pred_check
    _
  $region15: #{_basic_conv2d.1} parent=0 // pred_check_branch
    %204 = sbr.rel (0) target = $region17
  $region16: #{_basic_conv2d.1} parent=0 // pred_region
    _
  $region17: #{_basic_conv2d.1} parent=0 // pred_fallthru
    _

</llo_original>
